<compile_context>
chip_gen: v7x
topology: tpu7x:2x2x1
jax: 0.10.0
libtpu: 0.0.40
codegen_flags: <defaults>
</compile_context>

<pallas_src>
import math

import jax
import jax.numpy as jnp
from jax.experimental import pallas as pl
from jax.experimental.pallas import tpu as pltpu

LBD = 0.1
_INV_SQRT2 = 1.0 / math.sqrt(2.0)
_INV_SQRT_2PI = 1.0 / math.sqrt(2.0 * math.pi)

# Abramowitz & Stegun 7.1.26 erf coefficients (|err| < 1.5e-7).
_A1, _A2, _A3, _A4, _A5 = (0.254829592, -0.284496736, 1.421413741,
                           -1.453152027, 1.061405429)
_P = 0.3275911

_MIN_PALLAS_BYTES = 256 * 1024   # below this, fused XLA elementwise is faster


def _relu_geometry_r_kernel(mu_ref, sigma_ref, out_ref):
    """outputR tile: (tile_r, tile_l) elementwise, per-row sigma broadcast."""
    mu = mu_ref[...].astype(jnp.float32)            # (tr, tl)
    sigma = sigma_ref[...]                          # (tr, 1)  f32

    # Per-row constants live on the (tr, 1) column only (~tr/8 vregs of work).
    inv_s = _INV_SQRT2 / sigma                      # 1/(sqrt(2)*sigma)
    gscale = _INV_SQRT_2PI * sigma                  # sigma / sqrt(2*pi)

    am = jnp.abs(mu)
    az = am * inv_s                                 # |z|, lane-broadcast column

    # Shared exponential: exp(-z^2) is both the gaussian term and the A&S
    # erf-approximation exponent (single EUP exp per element).
    e = jnp.exp(-(az * az))

    # A&S 7.1.26: erf(|z|) = 1 - poly(t)*exp(-z^2), t = 1/(1 + p*|z|).
    # Exact divide kept (EUP + a couple of refinement VALU ops) for accuracy.
    t = 1.0 / (1.0 + _P * az)
    poly = ((((_A5 * t + _A4) * t + _A3) * t + _A2) * t + _A1) * t
    erf_abs = 1.0 - poly * e

    # sign(z) == sign(mu) since sigma > 0, so mu*erf(z) == |mu|*erf(|z|):
    #   0.5*mu - 0.5*mu*erf(-z) + c*sigma*exp(-z^2)
    #     == 0.5*(mu + |mu|*erf(|z|)) + (c*sigma)*exp(-z^2)
    out = 0.5 * (mu + am * erf_abs) + gscale * e
    out_ref[...] = out.astype(out_ref.dtype)


def _tpu_params():
    """Best-effort hardware query; conservative fallbacks if unavailable."""
    vmem_bytes = 64 * 1024 * 1024     # assume the smallest (v7x per-TC) VMEM
    num_cores = 1                     # assume single TensorCore per device
    try:
        info = pltpu.get_tpu_info()
        vmem_bytes = int(getattr(info, "vmem_capacity_bytes", vmem_bytes))
        for attr in ("num_cores", "tensor_cores_per_chip", "cores_per_chip"):
            v = getattr(info, attr, None)
            if v:
                num_cores = int(v)
                break
    except Exception:
        pass
    try:
        v = getattr(jax.devices()[0], "num_cores", None)
        if v:
            num_cores = max(num_cores, int(v))
    except Exception:
        pass
    return vmem_bytes, num_cores


def _pick_tiles(rows, cols, itemsize, vmem_limit_bytes, num_cores):
    """Pick (sublane, lane) tile sizes: lane-dense, VMEM-budgeted, megacore-aware."""
    sub_mult = 8 * max(1, 4 // max(1, itemsize))    # 8 (f32), 16 (bf16), 32 (i8)

    # Working set: in + out, each double-buffered -> 4 live tiles (+ tiny
    # sigma columns).  Keep 4*tile <= 3/4 of the scoped VMEM limit.
    tile_budget = (vmem_limit_bytes * 3) // 16      # bytes per tile

    # Lane (last) dim: full extent if it fits, else a big multiple of 128
    # (lane-dense output stores are the biggest single lever; never 128-wide).
    max_l = 4096
    tile_l = cols if cols <= max_l else max_l

    # Sublane (second-last) dim: full rows if they fit, else up to 512 rows,
    # capped by the per-tile VMEM budget, rounded to the packing multiple.
    max_r_by_budget = max(sub_mult,
                          (tile_budget // max(1, tile_l * itemsize))
                          // sub_mult * sub_mult)
    tile_r_cap = min(512, max_r_by_budget)
    if rows <= tile_r_cap:
        tile_r = rows                                # full extent is always legal
    else:
        tile_r = max(sub_mult, (tile_r_cap // sub_mult) * sub_mult)

    # Megacore: only on multi-TensorCore chips, give the grid >= 2 steps so the
    # "parallel" axes can shard -- split rows (sublane), keep lanes wide.
    if (num_cores >= 2
            and pl.cdiv(rows, tile_r) * pl.cdiv(cols, tile_l) < 2
            and rows >= 2 * sub_mult):
        half = pl.cdiv(rows, 2)
        tile_r = max(sub_mult, ((half + sub_mult - 1) // sub_mult) * sub_mult)

    return tile_r, tile_l


def relu_geometry(input_r, input_spd, lbd=LBD, use_pallas=None):
    """Pallas TPU implementation of ReLU_Geometry.forward (4-D inputR case)."""
    N, C, H, W = input_r.shape
    assert input_spd.shape == (N, C, C)
    # TODO(synk): only the 4-D inputR case of the PyTorch module is implemented.

    # ---- outputSPD: trivial identity shift, hoisted to plain XLA -----------
    eye = jnp.eye(C, dtype=input_spd.dtype)
    out_spd = input_spd + jnp.asarray(lbd, input_spd.dtype) * eye

    # ---- per-(n, c) sigma computed once, outside the hot loop --------------
    diag = jnp.diagonal(input_spd, axis1=1, axis2=2).astype(jnp.float32)  # (N, C)
    # No clamping, to match the PyTorch reference exactly (a zero diagonal
    # entry yields inf/NaN there too).
    sigma = jnp.sqrt(diag).reshape(N * C, 1)

    rows, cols = N * C, H * W
    itemsize = jnp.dtype(input_r.dtype).itemsize
    if use_pallas is None:
        use_pallas = rows * cols * itemsize >= _MIN_PALLAS_BYTES

    if not use_pallas:
        # Tiny inputs: fixed kernel-dispatch cost dominates; a fused XLA
        # elementwise expression is strictly faster.
        mu = input_r.astype(jnp.float32)
        s = sigma.reshape(N, C, 1, 1)
        out_r = (0.5 * mu
                 - 0.5 * mu * jax.scipy.special.erf(-mu * (_INV_SQRT2 / s))
                 + (_INV_SQRT_2PI * s) * jnp.exp(-(mu * mu) / (2.0 * s * s)))
        return out_r.astype(input_r.dtype), out_spd

    # ---- lane-dense elementwise kernel over (N*C, H*W) ---------------------
    mu2d = input_r.reshape(rows, cols)              # zero-copy reshape

    vmem_bytes, num_cores = _tpu_params()
    # 64 MiB scoped limit on 128-MiB-VMEM parts (v5e/v6e), 32 MiB on v7x.
    vmem_limit = int(max(32 * 1024 * 1024,
                         min(vmem_bytes // 2, 64 * 1024 * 1024)))

    tile_r, tile_l = _pick_tiles(rows, cols, itemsize, vmem_limit, num_cores)
    grid = (pl.cdiv(rows, tile_r), pl.cdiv(cols, tile_l))

    out2d = pl.pallas_call(
        _relu_geometry_r_kernel,
        out_shape=jax.ShapeDtypeStruct((rows, cols), input_r.dtype),
        grid=grid,
        in_specs=[
            pl.BlockSpec((tile_r, tile_l), lambda i, j: (i, j)),
            pl.BlockSpec((tile_r, 1), lambda i, j: (i, 0)),
        ],
        out_specs=pl.BlockSpec((tile_r, tile_l), lambda i, j: (i, j)),
        compiler_params=pltpu.CompilerParams(
            dimension_semantics=("parallel", "parallel"),
            vmem_limit_bytes=vmem_limit,
        ),
    )(mu2d, sigma)

    return out2d.reshape(N, C, H, W), out_spd


def _reference(input_r, input_spd, lbd=LBD):
    # Pure-JAX reference (mirrors the PyTorch forward exactly).
    C = input_r.shape[1]
    diag = jnp.diagonal(input_spd, axis1=1, axis2=2)          # (N, C)
    sigma = jnp.sqrt(diag)[:, :, None, None]                  # (N, C, 1, 1)
    eye = jnp.eye(C, dtype=input_spd.dtype)
    out_spd = input_spd + lbd * eye
    mu = input_r
    out_r = (0.5 * mu
             - 0.5 * mu * jax.scipy.special.erf(-mu / (math.sqrt(2.0) * sigma))
             + _INV_SQRT_2PI * sigma * jnp.exp(-mu ** 2 / (2.0 * sigma ** 2)))
    return out_r, out_spd


def _make_inputs(key, N, C, H, W):
    k_r, k_spd = jax.random.split(key)
    input_r = jax.random.normal(k_r, (N, C, H, W), dtype=jnp.float32)
    # Valid SPD matrix per sample: A A^T / C + 0.5 I (strictly positive diagonal).
    A = jax.random.normal(k_spd, (N, C, C), dtype=jnp.float32)
    input_spd = (jnp.einsum("nij,nkj->nik", A, A) / C
                 + 0.5 * jnp.eye(C, dtype=jnp.float32))
    return input_r, input_spd


if __name__ == "__main__":
    key = jax.random.PRNGKey(0)
    k1, k2 = jax.random.split(key)

    # --- small demo shape, forced through the Pallas path -------------------
    input_r, input_spd = _make_inputs(k1, 2, 4, 16, 16)
    out_r, out_spd = relu_geometry(input_r, input_spd, lbd=LBD, use_pallas=True)
    jax.block_until_ready((out_r, out_spd))
    ref_r, ref_spd = _reference(input_r, input_spd, lbd=LBD)
    assert out_r.shape == (2, 4, 16, 16) and out_spd.shape == (2, 4, 4)
    assert jnp.allclose(out_r, ref_r, rtol=1e-4, atol=1e-5), "outputR mismatch"
    assert jnp.allclose(out_spd, ref_spd, rtol=1e-5, atol=1e-6), "outputSPD mismatch"

    # --- medium shape, auto dispatch (>= 256 KiB -> Pallas, multi-row tiles) --
    input_r2, input_spd2 = _make_inputs(k2, 4, 8, 32, 64)
    out_r2, out_spd2 = relu_geometry(input_r2, input_spd2, lbd=LBD)
    jax.block_until_ready((out_r2, out_spd2))
    ref_r2, ref_spd2 = _reference(input_r2, input_spd2, lbd=LBD)
    assert jnp.allclose(out_r2, ref_r2, rtol=1e-4, atol=1e-5), "outputR mismatch (2)"
    assert jnp.allclose(out_spd2, ref_spd2, rtol=1e-5, atol=1e-6), "outputSPD mismatch (2)"

    print("KERNEL_OK")
</pallas_src>

<mosaic_0001>
module attributes {stable_mosaic.version = 11 : i64} {
  func.func @_relu_geometry_r_kernel(%arg0: i32, %arg1: i32, %arg2: memref<8x256xf32, #tpu.memory_space<vmem>>, %arg3: memref<8x1xf32, #tpu.memory_space<vmem>>, %arg4: memref<8x256xf32, #tpu.memory_space<vmem>>) attributes {dimension_semantics = [#tpu.dimension_semantics<parallel>, #tpu.dimension_semantics<parallel>], iteration_bounds = array<i64: 1, 1>, scalar_prefetch = 0 : i64, scratch_operands = 0 : i64, tpu.core_type = #tpu.core_type<tc>, window_params = [{transform_indices = @transform_0, window_bounds = array<i64: 8, 256>}, {transform_indices = @transform_1, window_bounds = array<i64: 8, 1>}, {transform_indices = @transform_2, window_bounds = array<i64: 8, 256>}]} {
    %c0 = arith.constant 0 : index
    %c0_0 = arith.constant 0 : index
    %0 = vector.load %arg2[%c0, %c0_0] : memref<8x256xf32, #tpu.memory_space<vmem>>, vector<8x256xf32>
    %c0_1 = arith.constant 0 : index
    %c0_2 = arith.constant 0 : index
    %1 = vector.load %arg3[%c0_1, %c0_2] : memref<8x1xf32, #tpu.memory_space<vmem>>, vector<8x1xf32>
    %cst = arith.constant 0.707106769 : f32
    %2 = vector.broadcast %cst : f32 to vector<8x1xf32>
    %3 = arith.divf %2, %1 : vector<8x1xf32>
    %cst_3 = arith.constant 0.398942292 : f32
    %4 = vector.broadcast %cst_3 : f32 to vector<8x1xf32>
    %5 = arith.mulf %4, %1 : vector<8x1xf32>
    %6 = math.absf %0 : vector<8x256xf32>
    %7 = vector.broadcast %3 : vector<8x1xf32> to vector<8x256xf32>
    %8 = arith.mulf %6, %7 : vector<8x256xf32>
    %9 = arith.mulf %8, %8 : vector<8x256xf32>
    %cst_4 = arith.constant 0.000000e+00 : f32
    %10 = vector.broadcast %cst_4 : f32 to vector<8x256xf32>
    %11 = arith.subf %10, %9 : vector<8x256xf32>
    %12 = math.exp %11 : vector<8x256xf32>
    %cst_5 = arith.constant 0.327591091 : f32
    %13 = vector.broadcast %cst_5 : f32 to vector<8x256xf32>
    %14 = arith.mulf %13, %8 : vector<8x256xf32>
    %cst_6 = arith.constant 1.000000e+00 : f32
    %15 = vector.broadcast %cst_6 : f32 to vector<8x256xf32>
    %16 = arith.addf %15, %14 : vector<8x256xf32>
    %cst_7 = arith.constant 1.000000e+00 : f32
    %17 = vector.broadcast %cst_7 : f32 to vector<8x256xf32>
    %18 = arith.divf %17, %16 : vector<8x256xf32>
    %cst_8 = arith.constant 1.06140542 : f32
    %19 = vector.broadcast %cst_8 : f32 to vector<8x256xf32>
    %20 = arith.mulf %19, %18 : vector<8x256xf32>
    %cst_9 = arith.constant -1.45315206 : f32
    %21 = vector.broadcast %cst_9 : f32 to vector<8x256xf32>
    %22 = arith.addf %20, %21 : vector<8x256xf32>
    %23 = arith.mulf %22, %18 : vector<8x256xf32>
    %cst_10 = arith.constant 1.42141378 : f32
    %24 = vector.broadcast %cst_10 : f32 to vector<8x256xf32>
    %25 = arith.addf %23, %24 : vector<8x256xf32>
    %26 = arith.mulf %25, %18 : vector<8x256xf32>
    %cst_11 = arith.constant -0.284496725 : f32
    %27 = vector.broadcast %cst_11 : f32 to vector<8x256xf32>
    %28 = arith.addf %26, %27 : vector<8x256xf32>
    %29 = arith.mulf %28, %18 : vector<8x256xf32>
    %cst_12 = arith.constant 0.254829586 : f32
    %30 = vector.broadcast %cst_12 : f32 to vector<8x256xf32>
    %31 = arith.addf %29, %30 : vector<8x256xf32>
    %32 = arith.mulf %31, %18 : vector<8x256xf32>
    %33 = arith.mulf %32, %12 : vector<8x256xf32>
    %cst_13 = arith.constant 1.000000e+00 : f32
    %34 = vector.broadcast %cst_13 : f32 to vector<8x256xf32>
    %35 = arith.subf %34, %33 : vector<8x256xf32>
    %36 = arith.mulf %6, %35 : vector<8x256xf32>
    %37 = arith.addf %0, %36 : vector<8x256xf32>
    %cst_14 = arith.constant 5.000000e-01 : f32
    %38 = vector.broadcast %cst_14 : f32 to vector<8x256xf32>
    %39 = arith.mulf %38, %37 : vector<8x256xf32>
    %40 = vector.broadcast %5 : vector<8x1xf32> to vector<8x256xf32>
    %41 = arith.mulf %40, %12 : vector<8x256xf32>
    %42 = arith.addf %39, %41 : vector<8x256xf32>
    %c0_15 = arith.constant 0 : index
    %c0_16 = arith.constant 0 : index
    %43 = vector.load %arg4[%c0_15, %c0_16] : memref<8x256xf32, #tpu.memory_space<vmem>>, vector<8x256xf32>
    tpu.vector_store %arg4[%c0_15, %c0_16], %42 {strides = array<i32>} : memref<8x256xf32, #tpu.memory_space<vmem>>, vector<8x256xf32>,
    return
  }
  func.func @transform_0(%arg0: i32, %arg1: i32) -> (i32, i32) {
    %c0_i32 = arith.constant 0 : i32
    return %arg0, %arg1 : i32, i32
  }
  func.func @transform_1(%arg0: i32, %arg1: i32) -> (i32, i32) {
    %c0_i32 = arith.constant 0 : i32
    %c0_i32_0 = arith.constant 0 : i32
    return %arg0, %c0_i32 : i32, i32
  }
  func.func @transform_2(%arg0: i32, %arg1: i32) -> (i32, i32) {
    %c0_i32 = arith.constant 0 : i32
    return %arg0, %arg1 : i32, i32
  }
}

</mosaic_0001>

<llo_original>
// kernel: tpu_custom_call.1
$region0: #{tpu_custom_call.1}
  #allocation0 [shape = 'u32[]', space=smem, size = 0x4, offset = 0x4, fixed_abs, tag = 'smem constant byte address 0x4 - core index']
  #allocation1 [shape = 'u32[144,128]{1,0:T(1,128)}', space=vmem, size = 0x12000, scoped, tag = 'internal scratch']
  %s0 = inlined_call_operand.hbm [shape: f32[8,256], index: 0, kind: input, shape index: {}]
  %s1 = inlined_call_operand.vmem [shape: f32[8,1], index: 1, kind: input, shape index: {}]
  %s2 = inlined_call_operand.hbm [shape: f32[8,256], index: 2, kind: output, shape index: {}]
  %s3 = sld [smem:[#allocation0]]
  $region22: #{tpu_custom_call.1} parent=0
    _
  %s5 = ssub.s32 1, %s3
  %s6 = scalar_select 0, %s5, %s3
  $region1: #{tpu_custom_call.1} parent=0
    #allocation2 [shape = 'u8[8192]{0}', space=vmem, size = 0x2000, scoped, tag = 'input window, operand 0, single buffered']
    #allocation3 [shape = 's32[1]{0}', space=sflag, size = 0x4, scoped, tag = 'scoped memory for tpu_custom_call.1']
    #allocation4 [shape = 's32[1]{0}', space=sflag, size = 0x4, scoped, tag = 'scoped memory for tpu_custom_call.1']
    #allocation5 [shape = 'u8[8192]{0}', space=vmem, size = 0x2000, scoped, tag = 'output window, operand 0, single buffered']
    %7 = vsyncpa [#allocation3], 0
    %8 = vsyncpa [#allocation4], 0
    // Predicated region
    $region2: #{tpu_custom_call.1} parent=1 // pred_check
      _
    $region3: #{tpu_custom_call.1} parent=1 // pred_check_branch
      %10 = sbr.rel (0) target = $region5
    $region4: #{tpu_custom_call.1} parent=1 // pred_region
      %s12 = ssub.s32 256, 256
      %13 = vsyncadd [#allocation3], %s12
      %s15 = sshll.u32 [#allocation2], 4
      %s16 = int_to_ptr.vmem [resolvable:$true] %s15
      %18 = dma.hbm_to_vmem [thread:$0]  %s0, 256, %s16, [#allocation3]
    $region5: #{tpu_custom_call.1} parent=1 // pred_fallthru
      _
    // Predicated region
    $region6: #{tpu_custom_call.1} parent=1 // pred_check
      _
    $region7: #{tpu_custom_call.1} parent=1 // pred_check_branch
      %20 = sbr.rel (0) target = $region9
    $region8: #{tpu_custom_call.1} parent=1 // pred_region
      _
    $region9: #{tpu_custom_call.1} parent=1 // pred_fallthru
      _
    // Predicated region
    $region10: #{tpu_custom_call.1} parent=1 // pred_check
      _
    $region11: #{tpu_custom_call.1} parent=1 // pred_check_branch
      %22 = sbr.rel (0) target = $region13
    $region12: #{tpu_custom_call.1} parent=1 // pred_region
      %23 = dma.done [#allocation3], 256
    $region13: #{tpu_custom_call.1} parent=1 // pred_fallthru
      _
    %v24 = vld [vmem:[#allocation2] sm:$0xff]
    %v25 = vld [vmem:[#allocation2 + $0x8] sm:$0xff]
    %v26 = vld [vmem:[%s1] sm:$0xff]
    %v27 = vrcp.pop %v26
    %v28 = vmul.f32 0.70710677, %v27
    %v29 = vmul.f32 %v26, 0.3989423
    %v30 = vand.u32 2147483647, %v24
    %v31 = vand.u32 2147483647, %v25
    %33 = vset.pattern.permute.xlu0 0
    %34 = vperm.xlu0 %33, %v28
    %v35 = vpop.permute.xlu0 %34
    %v37 = vmul.f32 %v30, %v35
    %v38 = vmul.f32 %v31, %v35
    %v39 = vmul.f32 %v37, %v37
    %v40 = vmul.f32 %v38, %v38
    %v41 = vsub.f32 0.0, %v39
    %v42 = vsub.f32 0.0, %v40
    %v43 = vmul.f32 %v41, 1.442695
    %v44 = vpow.pop %v43
    %v45 = vmul.f32 %v42, 1.442695
    %v46 = vpow.pop %v45
    %v47 = vmul.f32 %v37, 0.3275911
    %v48 = vmul.f32 %v38, 0.3275911
    %v49 = vadd.f32 %v47, 1.0
    %v50 = vadd.f32 %v48, 1.0
    %v51 = vrcp.pop %v49
    %v52 = vmul.f32 1.0, %v51
    %v53 = vrcp.pop %v50
    %v54 = vmul.f32 1.0, %v53
    %v55 = vmul.f32 %v52, 1.0614054
    %v56 = vmul.f32 %v54, 1.0614054
    %v57 = vadd.f32 %v55, -1.4531521
    %v58 = vadd.f32 %v56, -1.4531521
    %v59 = vmul.f32 %v57, %v52
    %v60 = vmul.f32 %v58, %v54
    %v61 = vadd.f32 %v59, 1.4214138
    %v62 = vadd.f32 %v60, 1.4214138
    %v63 = vmul.f32 %v61, %v52
    %v64 = vmul.f32 %v62, %v54
    %v65 = vadd.f32 %v63, -0.28449672
    %v66 = vadd.f32 %v64, -0.28449672
    %v67 = vmul.f32 %v65, %v52
    %v68 = vmul.f32 %v66, %v54
    %v69 = vadd.f32 %v67, 0.2548296
    %v70 = vadd.f32 %v68, 0.2548296
    %v71 = vmul.f32 %v69, %v52
    %v72 = vmul.f32 %v70, %v54
    %v73 = vmul.f32 %v71, %v44
    %v74 = vmul.f32 %v72, %v46
    %v75 = vsub.f32 1.0, %v73
    %v76 = vsub.f32 1.0, %v74
    %v77 = vmul.f32 %v30, %v75
    %v78 = vmul.f32 %v31, %v76
    %v79 = vadd.f32 %v24, %v77
    %v80 = vadd.f32 %v25, %v78
    %v81 = vmul.f32 %v79, 0.5
    %v82 = vmul.f32 %v80, 0.5
    %84 = vset.pattern.permute.xlu0 0
    %85 = vperm.xlu0 %84, %v29
    %v86 = vpop.permute.xlu0 %85
    %v88 = vmul.f32 %v86, %v44
    %v89 = vmul.f32 %v86, %v46
    %v90 = vadd.f32 %v81, %v88
    %v91 = vadd.f32 %v82, %v89
    %92 = vst [vmem:[#allocation5] sm:$0xff] %v90
    %93 = vst [vmem:[#allocation5 + $0x8] sm:$0xff] %v91
    // Predicated region
    $region14: #{tpu_custom_call.1} parent=1 // pred_check
      _
    $region15: #{tpu_custom_call.1} parent=1 // pred_check_branch
      %95 = sbr.rel (0) target = $region17
    $region16: #{tpu_custom_call.1} parent=1 // pred_region
      %s97 = ssub.s32 256, 256
      %98 = vsyncadd [#allocation4], %s97
      %s100 = sshll.u32 [#allocation5], 4
      %s101 = int_to_ptr.vmem [resolvable:$true] %s100
      %103 = dma.vmem_to_hbm [thread:$0]  %s101, 256, %s2, [#allocation4]
    $region17: #{tpu_custom_call.1} parent=1 // pred_fallthru
      _
    // Predicated region
    $region18: #{tpu_custom_call.1} parent=1 // pred_check
      _
    $region19: #{tpu_custom_call.1} parent=1 // pred_check_branch
      %105 = sbr.rel (0) target = $region21
    $region20: #{tpu_custom_call.1} parent=1 // pred_region
      %106 = dma.done [#allocation4], 256
    $region21: #{tpu_custom_call.1} parent=1 // pred_fallthru
      _
    %107 = vsyncpa [#allocation3], 1
    %108 = vsyncpa [#allocation4], 1

</llo_original>
